<compile_context>
chip_gen: v6e
topology: v6e:2x2x1
jax: 0.10.0
libtpu: 0.0.40
codegen_flags: <defaults>
</compile_context>

<pallas_src>
import functools
import math

import jax
import jax.numpy as jnp
from jax import lax
from jax.experimental import pallas as pl
from jax.experimental.pallas import tpu as pltpu


def _round_up(x, m):
    return (x + m - 1) // m * m


def _quantizer_kernel(z_ref, g_ref, w_ref, zq_ref, ind_ref, loss_ref, *,
                      inv_temperature, log_codebook_size, hard, n_valid):
    i = pl.program_id(0)
    tile_rows, k = z_ref.shape

    z = z_ref[...].astype(jnp.float32)                      # (tile, K)
    g = g_ref[...].astype(jnp.float32)                      # (tile, K) Gumbel(0,1)

    logits = (z + g) * inv_temperature

    # ---- argmax (first max on ties) & one-hot --------------------------------
    lmax = jnp.max(logits, axis=-1, keepdims=True)
    iota = lax.broadcasted_iota(jnp.int32, (tile_rows, k), 1)
    idx_col = jnp.min(jnp.where(logits == lmax, iota, k), axis=-1, keepdims=True)
    one_hot = (iota == idx_col).astype(jnp.float32)         # (tile, K)

    # ---- sel @ W in the weights' native dtype (bf16 MXU single-pass if bf16) --
    w = w_ref[...]                                          # (K, D), native dtype
    if hard:
        sel = one_hot.astype(w.dtype)                       # 0/1 exact in bf16
    else:
        e = jnp.exp(logits - lmax)
        inv_se = 1.0 / jnp.sum(e, axis=-1, keepdims=True)   # 1 recip per row
        sel = (e * inv_se).astype(w.dtype)                  # soft sample

    zq = jnp.dot(sel, w, preferred_element_type=jnp.float32)
    zq_ref[...] = zq.astype(zq_ref.dtype)

    # ---- lane-dense indices: (1,K) . (tile,K)^T -> (1, tile) on the MXU -------
    iota_row = lax.broadcasted_iota(jnp.int32, (1, k), 1).astype(jnp.float32)
    idx_row = lax.dot_general(iota_row, one_hot,
                              dimension_numbers=(((1,), (1,)), ((), ())),
                              preferred_element_type=jnp.float32)
    ind_ref[...] = idx_row.astype(jnp.int32)[None]          # (1, 1, tile)

    # ---- KL(softmax(z) || uniform) via logsumexp ------------------------------
    #   sum_k qy*log(qy*K) = (1/S) * sum_k zexp * ((z - zmax) + logK - logS)
    #   -> 1 log + 1 reciprocal per ROW instead of K logs + K divides.
    #   (drops the reference's +1e-10 epsilon; error per row is <= 1e-10)
    zmax = jnp.max(z, axis=-1, keepdims=True)
    zc = z - zmax
    zexp = jnp.exp(zc)
    s = jnp.sum(zexp, axis=-1, keepdims=True)               # (tile, 1)
    log_s = jnp.log(s)                                      # 1 log per row
    inv_s = 1.0 / s                                         # 1 recip per row
    kl = zexp * (zc + (log_codebook_size - log_s))          # (tile, K), VPU only
    kl_row = inv_s * jnp.sum(kl, axis=-1, keepdims=True)    # (tile, 1)
    if n_valid is not None:                                 # zero out padded rows
        rows = lax.broadcasted_iota(jnp.int32, (tile_rows, 1), 0) + i * tile_rows
        kl_row = jnp.where(rows < n_valid, kl_row, 0.0)
    loss_ref[...] = jnp.sum(kl_row, axis=0, keepdims=True)[None]   # (1, 1, 1)


def state_gumbel_quantize(z, emb_w, key, *, temperature=1.0, kld_scale=10.0,
                          hard=True, tile_n=2048, out_dtype=None):
    """Pallas forward of StateGumbelQuantizer.

    z:     (B, S, K) logits over the codebook (K = codebook_size), any float dtype
    emb_w: (K, D)    embedding table (D = embedding_dim)
    key:   jax PRNG key for the Gumbel noise
    returns (z_q (B,S,D), latent_loss scalar f32, ind (B,S) int32)
    """
    B, S, K = z.shape
    Kw, D = emb_w.shape
    assert Kw == K, "embedding table / logits codebook size mismatch"
    N = B * S
    if out_dtype is None:
        out_dtype = emb_w.dtype   # pass jnp.bfloat16 to halve z_q writeback (v5e)

    # ---- tile selection -------------------------------------------------------
    # (a) ensure >=2 tiles whenever N allows it so the "parallel" grid axis can
    #     shard across both v7x TensorCores;
    # (b) cap by a VMEM budget sized for v7x's smaller scoped VMEM;
    # (c) keep the row tile a multiple of 8 sublanes.
    tile_n = int(tile_n)
    half = _round_up(max(8, (N + 1) // 2), 8)
    tile_n = max(8, min(tile_n, half))
    bytes_per_row = 4 * (4 * K + 2 * D + 6 * K + 2)   # dbl-buffered z/g/zq + f32 temps
    vmem_budget = 24 * 1024 * 1024
    tile_cap = max(8, (vmem_budget // bytes_per_row) // 8 * 8)
    tile_n = _round_up(min(tile_n, tile_cap), 8)
    n_pad = _round_up(N, tile_n)
    num_tiles = n_pad // tile_n

    z2 = z.reshape(N, K)                      # native dtype; kernel upcasts
    if n_pad != N:
        z2 = jnp.pad(z2, ((0, n_pad - N), (0, 0)))

    # Gumbel(0,1) noise generated wrapper-side (portable: pltpu.prng_* has no
    # interpret/CPU lowering). Same key -> identical noise for hard/soft calls.
    gumbel = jax.random.gumbel(key, (n_pad, K), dtype=jnp.float32)

    kernel = functools.partial(
        _quantizer_kernel,
        inv_temperature=1.0 / float(temperature),
        log_codebook_size=math.log(float(K)),
        hard=bool(hard),
        n_valid=(N if n_pad != N else None),
    )

    zq, ind3, loss3 = pl.pallas_call(
        kernel,
        out_shape=(
            jax.ShapeDtypeStruct((n_pad, D), out_dtype),               # z_q rows
            jax.ShapeDtypeStruct((num_tiles, 1, tile_n), jnp.int32),   # lane-dense ind
            jax.ShapeDtypeStruct((num_tiles, 1, 1), jnp.float32),      # loss partials
        ),
        grid=(num_tiles,),
        in_specs=[
            pl.BlockSpec((tile_n, K), lambda i: (i, 0)),
            pl.BlockSpec((tile_n, K), lambda i: (i, 0)),
            pl.BlockSpec((K, D), lambda i: (0, 0)),        # table resident in VMEM
        ],
        out_specs=(
            pl.BlockSpec((tile_n, D), lambda i: (i, 0)),
            pl.BlockSpec((1, 1, tile_n), lambda i: (i, 0, 0)),
            pl.BlockSpec((1, 1, 1), lambda i: (i, 0, 0)),
        ),
        compiler_params=pltpu.CompilerParams(
            dimension_semantics=("parallel",),   # independent tiles -> v7x megacore
        ),
    )(z2, gumbel, emb_w)

    z_q = zq[:N].reshape(B, S, D)
    ind = ind3.reshape(-1)[:N].reshape(B, S)
    latent_loss = (jnp.float32(kld_scale) / jnp.float32(N)) * jnp.sum(loss3)
    return z_q, latent_loss, ind


def _reference_loss(z, codebook_size, kld_scale):
    qy = jax.nn.softmax(z, axis=2)
    return kld_scale * jnp.mean(jnp.sum(qy * jnp.log(qy * codebook_size + 1e-10),
                                        axis=2))


if __name__ == "__main__":
    codebook_size = 16   # K
    embedding_dim = 32   # D
    B, S = 2, 8

    root = jax.random.PRNGKey(0)
    k_z, k_w, k_g, k_z2 = jax.random.split(root, 4)

    z = jax.random.normal(k_z, (B, S, codebook_size), dtype=jnp.float32)
    # bf16-representable weights make "one-hot @ W == gathered rows" exact under
    # any MXU precision mode, so the z_q check below can be tight.
    emb_w = jax.random.normal(k_w, (codebook_size, embedding_dim),
                              dtype=jnp.float32).astype(jnp.bfloat16).astype(jnp.float32)

    z_q, latent_loss, ind = state_gumbel_quantize(
        z, emb_w, k_g, temperature=1.0, kld_scale=10.0, hard=True)
    jax.block_until_ready((z_q, latent_loss, ind))

    # 1) latent loss is noise-independent -> compare against pure-JAX reference.
    loss_ref = _reference_loss(z, codebook_size, 10.0)
    assert jnp.allclose(latent_loss, loss_ref, atol=1e-4, rtol=1e-4), \
        f"loss mismatch: {latent_loss} vs {loss_ref}"

    # 2) indices are valid codebook entries.
    assert ind.shape == (B, S) and ind.dtype == jnp.int32
    assert bool(jnp.all((ind >= 0) & (ind < codebook_size))), "ind out of range"

    # 3) hard one-hot selection -> z_q rows equal the chosen embedding rows.
    assert jnp.allclose(z_q, emb_w[ind], atol=1e-5, rtol=1e-5), "z_q != embedding[ind]"

    # 4) soft path (training, straight_through=False): same key -> same noise ->
    #    same argmax, identical latent loss, finite soft z_q.
    z_q_s, loss_s, ind_s = state_gumbel_quantize(
        z, emb_w, k_g, temperature=1.0, kld_scale=10.0, hard=False)
    jax.block_until_ready((z_q_s, loss_s, ind_s))
    assert jnp.array_equal(ind_s, ind), "hard/soft argmax mismatch for identical noise"
    assert jnp.allclose(loss_s, latent_loss, atol=1e-5, rtol=1e-5), "loss mismatch (soft)"
    assert bool(jnp.all(jnp.isfinite(z_q_s))), "non-finite soft z_q"

    # 5) multi-tile, padded grid (N not a multiple of the row tile).
    B2, S2 = 3, 100                 # N = 300 -> 2 tiles of 152 rows, 4 masked
    z_big = jax.random.normal(k_z2, (B2, S2, codebook_size), dtype=jnp.float32)
    zq_b, loss_b, ind_b = state_gumbel_quantize(
        z_big, emb_w, k_g, temperature=1.0, kld_scale=10.0, hard=True)
    jax.block_until_ready((zq_b, loss_b, ind_b))
    loss_b_ref = _reference_loss(z_big, codebook_size, 10.0)
    assert jnp.allclose(loss_b, loss_b_ref, atol=1e-4, rtol=1e-4), \
        f"padded loss mismatch: {loss_b} vs {loss_b_ref}"
    assert jnp.allclose(zq_b, emb_w[ind_b], atol=1e-5, rtol=1e-5), "padded z_q mismatch"
    assert bool(jnp.all((ind_b >= 0) & (ind_b < codebook_size))), "padded ind out of range"

    print("KERNEL_OK")
</pallas_src>

<mosaic_0001>
module attributes {stable_mosaic.version = 11 : i64} {
  func.func @_quantizer_kernel(%arg0: i32, %arg1: memref<8x16xf32, #tpu.memory_space<vmem>>, %arg2: memref<8x16xf32, #tpu.memory_space<vmem>>, %arg3: memref<16x32xf32, #tpu.memory_space<vmem>>, %arg4: memref<8x32xf32, #tpu.memory_space<vmem>>, %arg5: memref<1x1x8xi32, #tpu.memory_space<vmem>>, %arg6: memref<1x1x1xf32, #tpu.memory_space<vmem>>) attributes {dimension_semantics = [#tpu.dimension_semantics<parallel>], iteration_bounds = array<i64: 2>, scalar_prefetch = 0 : i64, scratch_operands = 0 : i64, tpu.core_type = #tpu.core_type<tc>, window_params = [{transform_indices = @transform_0, window_bounds = array<i64: 8, 16>}, {transform_indices = @transform_1, window_bounds = array<i64: 8, 16>}, {pipeline_mode = #tpu.pipeline_mode<synchronous>, transform_indices = @transform_2, window_bounds = array<i64: 16, 32>}, {transform_indices = @transform_3, window_bounds = array<i64: 8, 32>}, {transform_indices = @transform_4, window_bounds = array<i64: 1, 1, 8>}, {transform_indices = @transform_5, window_bounds = array<i64: 1, 1, 1>}]} {
    %c0 = arith.constant 0 : index
    %c0_0 = arith.constant 0 : index
    %0 = vector.load %arg1[%c0, %c0_0] : memref<8x16xf32, #tpu.memory_space<vmem>>, vector<8x16xf32>
    %c0_1 = arith.constant 0 : index
    %c0_2 = arith.constant 0 : index
    %1 = vector.load %arg2[%c0_1, %c0_2] : memref<8x16xf32, #tpu.memory_space<vmem>>, vector<8x16xf32>
    %2 = arith.addf %0, %1 : vector<8x16xf32>
    %cst = arith.constant 1.000000e+00 : f32
    %3 = vector.broadcast %cst : f32 to vector<8x16xf32>
    %4 = arith.mulf %2, %3 : vector<8x16xf32>
    %cst_3 = arith.constant dense<0xFF800000> : vector<8xf32>
    %5 = vector.multi_reduction <maximumf>, %4, %cst_3 [1] : vector<8x16xf32> to vector<8xf32>
    %6 = vector.shape_cast %5 : vector<8xf32> to vector<8x1xf32>
    %7 = tpu.iota {dimensions = array<i32: 1>} : vector<8x16xi32>
    %8 = vector.broadcast %6 : vector<8x1xf32> to vector<8x16xf32>
    %9 = arith.cmpf oeq, %4, %8 : vector<8x16xf32>
    %c16_i32 = arith.constant 16 : i32
    %10 = vector.broadcast %c16_i32 : i32 to vector<8x16xi32>
    %11 = arith.select %9, %7, %10 : vector<8x16xi1>, vector<8x16xi32>
    %cst_4 = arith.constant dense<2147483647> : vector<8xi32>
    %12 = vector.multi_reduction <minsi>, %11, %cst_4 [1] : vector<8x16xi32> to vector<8xi32>
    %13 = vector.shape_cast %12 : vector<8xi32> to vector<8x1xi32>
    %14 = vector.broadcast %13 : vector<8x1xi32> to vector<8x16xi32>
    %15 = arith.cmpi eq, %7, %14 : vector<8x16xi32>
    %16 = arith.extui %15 : vector<8x16xi1> to vector<8x16xi32>
    %17 = arith.sitofp %16 : vector<8x16xi32> to vector<8x16xf32>
    %c0_5 = arith.constant 0 : index
    %c0_6 = arith.constant 0 : index
    %18 = vector.load %arg3[%c0_5, %c0_6] : memref<16x32xf32, #tpu.memory_space<vmem>>, vector<16x32xf32>
    %cst_7 = arith.constant dense<0.000000e+00> : vector<8x32xf32>
    %19 = tpu.matmul %17, %18, %cst_7 {dimension_numbers = #tpu.dot_dimension_numbers<[1], [0], [0], [1], [0, 0, 1, 1], [], []>} : vector<8x16xf32>, vector<16x32xf32>, vector<8x32xf32> -> vector<8x32xf32>
    %c0_8 = arith.constant 0 : index
    %c0_9 = arith.constant 0 : index
    %20 = vector.load %arg4[%c0_8, %c0_9] : memref<8x32xf32, #tpu.memory_space<vmem>>, vector<8x32xf32>
    tpu.vector_store %arg4[%c0_8, %c0_9], %19 {strides = array<i32>} : memref<8x32xf32, #tpu.memory_space<vmem>>, vector<8x32xf32>,
    %21 = tpu.iota {dimensions = array<i32: 1>} : vector<1x16xi32>
    %22 = arith.sitofp %21 : vector<1x16xi32> to vector<1x16xf32>
    %cst_10 = arith.constant dense<0.000000e+00> : vector<1x8xf32>
    %23 = tpu.matmul %22, %17, %cst_10 {dimension_numbers = #tpu.dot_dimension_numbers<[1], [1], [0], [0], [0, 0, 1, 0], [], []>} : vector<1x16xf32>, vector<8x16xf32>, vector<1x8xf32> -> vector<1x8xf32>
    %24 = arith.fptosi %23 : vector<1x8xf32> to vector<1x8xi32>
    %25 = vector.shape_cast %24 : vector<1x8xi32> to vector<1x1x8xi32>
    %c0_11 = arith.constant 0 : index
    %c0_12 = arith.constant 0 : index
    %c0_13 = arith.constant 0 : index
    %26 = vector.load %arg5[%c0_11, %c0_12, %c0_13] : memref<1x1x8xi32, #tpu.memory_space<vmem>>, vector<1x1x8xi32>
    tpu.vector_store %arg5[%c0_11, %c0_12, %c0_13], %25 {strides = array<i32>} : memref<1x1x8xi32, #tpu.memory_space<vmem>>, vector<1x1x8xi32>,
    %cst_14 = arith.constant dense<0xFF800000> : vector<8xf32>
    %27 = vector.multi_reduction <maximumf>, %0, %cst_14 [1] : vector<8x16xf32> to vector<8xf32>
    %28 = vector.shape_cast %27 : vector<8xf32> to vector<8x1xf32>
    %29 = vector.broadcast %28 : vector<8x1xf32> to vector<8x16xf32>
    %30 = arith.subf %0, %29 : vector<8x16xf32>
    %31 = math.exp %30 : vector<8x16xf32>
    %cst_15 = arith.constant dense<0.000000e+00> : vector<8xf32>
    %32 = vector.multi_reduction <add>, %31, %cst_15 [1] : vector<8x16xf32> to vector<8xf32>
    %33 = vector.shape_cast %32 : vector<8xf32> to vector<8x1xf32>
    %34 = math.log %33 : vector<8x1xf32>
    %cst_16 = arith.constant 1.000000e+00 : f32
    %35 = vector.broadcast %cst_16 : f32 to vector<8x1xf32>
    %36 = arith.divf %35, %33 : vector<8x1xf32>
    %cst_17 = arith.constant 2.77258873 : f32
    %37 = vector.broadcast %cst_17 : f32 to vector<8x1xf32>
    %38 = arith.subf %37, %34 : vector<8x1xf32>
    %39 = vector.broadcast %38 : vector<8x1xf32> to vector<8x16xf32>
    %40 = arith.addf %30, %39 : vector<8x16xf32>
    %41 = arith.mulf %31, %40 : vector<8x16xf32>
    %cst_18 = arith.constant dense<0.000000e+00> : vector<8xf32>
    %42 = vector.multi_reduction <add>, %41, %cst_18 [1] : vector<8x16xf32> to vector<8xf32>
    %43 = vector.shape_cast %42 : vector<8xf32> to vector<8x1xf32>
    %44 = arith.mulf %36, %43 : vector<8x1xf32>
    %cst_19 = arith.constant dense<0.000000e+00> : vector<1xf32>
    %45 = vector.multi_reduction <add>, %44, %cst_19 [0] : vector<8x1xf32> to vector<1xf32>
    %46 = vector.shape_cast %45 : vector<1xf32> to vector<1x1xf32>
    %47 = vector.shape_cast %46 : vector<1x1xf32> to vector<1x1x1xf32>
    %c0_20 = arith.constant 0 : index
    %c0_21 = arith.constant 0 : index
    %c0_22 = arith.constant 0 : index
    %48 = vector.load %arg6[%c0_20, %c0_21, %c0_22] : memref<1x1x1xf32, #tpu.memory_space<vmem>>, vector<1x1x1xf32>
    tpu.vector_store %arg6[%c0_20, %c0_21, %c0_22], %47 {strides = array<i32>} : memref<1x1x1xf32, #tpu.memory_space<vmem>>, vector<1x1x1xf32>,
    return
  }
  func.func @transform_0(%arg0: i32) -> (i32, i32) {
    %c0_i32 = arith.constant 0 : i32
    %c0_i32_0 = arith.constant 0 : i32
    return %arg0, %c0_i32 : i32, i32
  }
  func.func @transform_1(%arg0: i32) -> (i32, i32) {
    %c0_i32 = arith.constant 0 : i32
    %c0_i32_0 = arith.constant 0 : i32
    return %arg0, %c0_i32 : i32, i32
  }
  func.func @transform_2(%arg0: i32) -> (i32, i32) {
    %c0_i32 = arith.constant 0 : i32
    %c0_i32_0 = arith.constant 0 : i32
    %c0_i32_1 = arith.constant 0 : i32
    return %c0_i32, %c0_i32_0 : i32, i32
  }
  func.func @transform_3(%arg0: i32) -> (i32, i32) {
    %c0_i32 = arith.constant 0 : i32
    %c0_i32_0 = arith.constant 0 : i32
    return %arg0, %c0_i32 : i32, i32
  }
  func.func @transform_4(%arg0: i32) -> (i32, i32, i32) {
    %c0_i32 = arith.constant 0 : i32
    %c0_i32_0 = arith.constant 0 : i32
    %c0_i32_1 = arith.constant 0 : i32
    return %arg0, %c0_i32, %c0_i32_0 : i32, i32, i32
  }
  func.func @transform_5(%arg0: i32) -> (i32, i32, i32) {
    %c0_i32 = arith.constant 0 : i32
    %c0_i32_0 = arith.constant 0 : i32
    %c0_i32_1 = arith.constant 0 : i32
    return %arg0, %c0_i32, %c0_i32_0 : i32, i32, i32
  }
}

</mosaic_0001>

<llo_original>
// kernel: tpu_custom_call.1
$region0: #{tpu_custom_call.1}
  #allocation0 [shape = 'u32[]', space=smem, size = 0x4, offset = 0x4, fixed_abs, tag = 'smem constant byte address 0x4 - core index']
  #allocation1 [shape = 'u32[144,128]{1,0:T(1,128)}', space=vmem, size = 0x12000, scoped, tag = 'internal scratch']
  %s0 = inlined_call_operand.hbm [shape: f32[16,16], index: 0, kind: input, shape index: {}]
  %s1 = inlined_call_operand.hbm [shape: f32[16,16], index: 1, kind: input, shape index: {}]
  %s2 = inlined_call_operand.hbm [shape: f32[16,32], index: 2, kind: input, shape index: {}]
  %s3 = inlined_call_operand.hbm [shape: f32[16,32], index: 3, kind: output, shape index: {0}]
  %s4 = inlined_call_operand.hbm [shape: s32[2,1,8], index: 4, kind: output, shape index: {1}]
  %s5 = inlined_call_operand.vmem [shape: f32[2,1,1], index: 5, kind: output, shape index: {2}]
  %6 = xla_tuple %s3, %s4, %s5
  %s7 = sld [smem:[#allocation0]]
  $region73: #{tpu_custom_call.1} parent=0
    _
  %s9 = ssub.s32 1, %s7
  %s10 = scalar_select 0, %s9, %s7
  $region1: #{tpu_custom_call.1} parent=0
    #allocation2 [shape = 'u8[8192]{0}', space=vmem, size = 0x2000, scoped, tag = 'input window, operand 0']
    #allocation3 [shape = 's32[2]{0}', space=sflag, size = 0x8, scoped, tag = 'scoped memory for tpu_custom_call.1']
    #allocation4 [shape = 's32[2]{0}', space=sflag, size = 0x8, scoped, tag = 'scoped memory for tpu_custom_call.1']
    #allocation5 [shape = 'u8[8192]{0}', space=vmem, size = 0x2000, scoped, tag = 'input window, operand 1']
    #allocation6 [shape = 's32[2]{0}', space=sflag, size = 0x8, scoped, tag = 'scoped memory for tpu_custom_call.1']
    #allocation7 [shape = 'u8[8192]{0}', space=vmem, size = 0x2000, scoped, tag = 'input window, operand 2, single buffered']
    #allocation8 [shape = 'u8[8192]{0}', space=vmem, size = 0x2000, scoped, tag = 'output window, operand 0']
    #allocation9 [shape = 'u8[1024]{0}', space=vmem, size = 0x400, scoped, tag = 'output window, operand 1']
    #allocation10 [shape = 's32[2]{0}', space=sflag, size = 0x8, scoped, tag = 'scoped memory for tpu_custom_call.1']
    %11 = vsyncpa [#allocation3], 0
    %s12 = scalar_lea.sflag [#allocation3], 1
    %13 = vsyncpa %s12, 0
    %14 = vsyncpa [#allocation6], 0
    %s15 = scalar_lea.sflag [#allocation6], 1
    %16 = vsyncpa %s15, 0
    %17 = vsyncpa [#allocation4], 0
    %s18 = scalar_lea.sflag [#allocation4], 1
    %19 = vsyncpa %s18, 0
    %20 = vsyncpa [#allocation10], 0
    %s21 = scalar_lea.sflag [#allocation10], 1
    %22 = vsyncpa %s21, 0
    loop: start=0, step=1, limit=4
    $region2: #{tpu_custom_call.1} parent=1 // loop_pre_header
      _
    $region3: #{tpu_custom_call.1} parent=1 // loop_header
      %s24 = sphi 0, %s28
      %p25 = scmp.ge.s32.totalorder %s24, 4
      %s34 = sphi 0, %s36
      %s37 = sphi 0, %s34
      %s38 = sphi 0, %s37
      %s54 = sphi 0, %s38
      %s60 = sphi 0, %s62
      %s63 = sphi 0, %s60
      %s64 = sphi 0, %s63
      %s80 = sphi 0, %s64
      %s84 = sphi 0, %s84
      %s86 = sphi 0, %s84
      %s87 = sphi 0, %s86
      %s101 = sphi 0, %s87
      %s107 = sphi 0, %s109
      %s110 = sphi 0, %s107
      %s111 = sphi 0, %s110
      %s127 = sphi 0, %s111
      %s133 = sphi 0, %s135
      %s136 = sphi 0, %s133
      %s137 = sphi 0, %s136
      %s153 = sphi 0, %s137
      %s159 = sphi 0, %s161
      %s162 = sphi 0, %s159
      %s163 = sphi 0, %s162
      %s179 = sphi 0, %s163
    $region4: #{tpu_custom_call.1} parent=1 // loop_header_branch
      %27 = sbr.rel (%p25) target = $region8
    $region5: #{tpu_custom_call.1} parent=1 // loop_body
      %s29 = ssub.s32 %s24, 1
      %s30 = ssub.s32 %s24, 2
      %s31 = sadd.s32 %s24, 1
      %s32 = ssub.s32 %s24, %s31
      %p33 = scmp.eq.s32.totalorder %s32, 0
      %s35 = sadd.s32 %s34, 1
      %s36 = scalar_select %p33, %s34, %s35
      %p39 = pneg %p33
      %p40 = scmp.eq.s32.totalorder %s24, 1
      %p41 = por %p39, %p40
      %p42 = scmp.ne.s32.totalorder %s34, %s37
      %p43 = scmp.eq.s32.totalorder %s24, 0
      %p44 = por %p42, %p43
      %p45 = scmp.ne.s32.totalorder %s34, %s37
      %p46 = scmp.eq.s32.totalorder %s29, 1
      %p47 = por %p45, %p46
      %p48 = scmp.ne.s32.totalorder %s37, %s38
      %p49 = scmp.eq.s32.totalorder %s29, 0
      %p50 = por %p48, %p49
      %p51 = scmp.ne.s32.totalorder %s37, %s38
      %p52 = scmp.eq.s32.totalorder %s30, 1
      %p53 = por %p51, %p52
      %p55 = scmp.ne.s32.totalorder %s38, %s54
      %p56 = scmp.eq.s32.totalorder %s30, 0
      %p57 = por %p55, %p56
      %s58 = ssub.s32 %s24, %s31
      %p59 = scmp.eq.s32.totalorder %s58, 0
      %s61 = sadd.s32 %s60, 1
      %s62 = scalar_select %p59, %s60, %s61
      %p65 = pneg %p59
      %p66 = scmp.eq.s32.totalorder %s24, 1
      %p67 = por %p65, %p66
      %p68 = scmp.ne.s32.totalorder %s60, %s63
      %p69 = scmp.eq.s32.totalorder %s24, 0
      %p70 = por %p68, %p69
      %p71 = scmp.ne.s32.totalorder %s60, %s63
      %p72 = scmp.eq.s32.totalorder %s29, 1
      %p73 = por %p71, %p72
      %p74 = scmp.ne.s32.totalorder %s63, %s64
      %p75 = scmp.eq.s32.totalorder %s29, 0
      %p76 = por %p74, %p75
      %p77 = scmp.ne.s32.totalorder %s63, %s64
      %p78 = scmp.eq.s32.totalorder %s30, 1
      %p79 = por %p77, %p78
      %p81 = scmp.ne.s32.totalorder %s64, %s80
      %p82 = scmp.eq.s32.totalorder %s30, 0
      %p83 = por %p81, %p82
      %s85 = sadd.s32 %s84, 1
      %p88 = scmp.eq.s32.totalorder %s24, 1
      %p89 = scmp.ne.s32.totalorder %s84, %s86
      %p90 = scmp.eq.s32.totalorder %s24, 0
      %p91 = por %p89, %p90
      %p92 = scmp.ne.s32.totalorder %s84, %s86
      %p93 = scmp.eq.s32.totalorder %s29, 1
      %p94 = por %p92, %p93
      %p95 = scmp.ne.s32.totalorder %s86, %s87
      %p96 = scmp.eq.s32.totalorder %s29, 0
      %p97 = por %p95, %p96
      %p98 = scmp.ne.s32.totalorder %s86, %s87
      %p99 = scmp.eq.s32.totalorder %s30, 1
      %p100 = por %p98, %p99
      %p102 = scmp.ne.s32.totalorder %s87, %s101
      %p103 = scmp.eq.s32.totalorder %s30, 0
      %p104 = por %p102, %p103
      %s105 = ssub.s32 %s24, %s31
      %p106 = scmp.eq.s32.totalorder %s105, 0
      %s108 = sadd.s32 %s107, 1
      %s109 = scalar_select %p106, %s107, %s108
      %p112 = pneg %p106
      %p113 = scmp.eq.s32.totalorder %s24, 1
      %p114 = por %p112, %p113
      %p115 = scmp.ne.s32.totalorder %s107, %s110
      %p116 = scmp.eq.s32.totalorder %s24, 0
      %p117 = por %p115, %p116
      %p118 = scmp.ne.s32.totalorder %s107, %s110
      %p119 = scmp.eq.s32.totalorder %s29, 1
      %p120 = por %p118, %p119
      %p121 = scmp.ne.s32.totalorder %s110, %s111
      %p122 = scmp.eq.s32.totalorder %s29, 0
      %p123 = por %p121, %p122
      %p124 = scmp.ne.s32.totalorder %s110, %s111
      %p125 = scmp.eq.s32.totalorder %s30, 1
      %p126 = por %p124, %p125
      %p128 = scmp.ne.s32.totalorder %s111, %s127
      %p129 = scmp.eq.s32.totalorder %s30, 0
      %p130 = por %p128, %p129
      %s131 = ssub.s32 %s24, %s31
      %p132 = scmp.eq.s32.totalorder %s131, 0
      %s134 = sadd.s32 %s133, 1
      %s135 = scalar_select %p132, %s133, %s134
      %p138 = pneg %p132
      %p139 = scmp.eq.s32.totalorder %s24, 1
      %p140 = por %p138, %p139
      %p141 = scmp.ne.s32.totalorder %s133, %s136
      %p142 = scmp.eq.s32.totalorder %s24, 0
      %p143 = por %p141, %p142
      %p144 = scmp.ne.s32.totalorder %s133, %s136
      %p145 = scmp.eq.s32.totalorder %s29, 1
      %p146 = por %p144, %p145
      %p147 = scmp.ne.s32.totalorder %s136, %s137
      %p148 = scmp.eq.s32.totalorder %s29, 0
      %p149 = por %p147, %p148
      %p150 = scmp.ne.s32.totalorder %s136, %s137
      %p151 = scmp.eq.s32.totalorder %s30, 1
      %p152 = por %p150, %p151
      %p154 = scmp.ne.s32.totalorder %s137, %s153
      %p155 = scmp.eq.s32.totalorder %s30, 0
      %p156 = por %p154, %p155
      %s157 = ssub.s32 %s24, %s31
      %p158 = scmp.eq.s32.totalorder %s157, 0
      %s160 = sadd.s32 %s159, 1
      %s161 = scalar_select %p158, %s159, %s160
      %p164 = pneg %p158
      %p165 = scmp.eq.s32.totalorder %s24, 1
      %p166 = por %p164, %p165
      %p167 = scmp.ne.s32.totalorder %s159, %s162
      %p168 = scmp.eq.s32.totalorder %s24, 0
      %p169 = por %p167, %p168
      %p170 = scmp.ne.s32.totalorder %s159, %s162
      %p171 = scmp.eq.s32.totalorder %s29, 1
      %p172 = por %p170, %p171
      %p173 = scmp.ne.s32.totalorder %s162, %s163
      %p174 = scmp.eq.s32.totalorder %s29, 0
      %p175 = por %p173, %p174
      %p176 = scmp.ne.s32.totalorder %s162, %s163
      %p177 = scmp.eq.s32.totalorder %s30, 1
      %p178 = por %p176, %p177
      %p180 = scmp.ne.s32.totalorder %s163, %s179
      %p181 = scmp.eq.s32.totalorder %s30, 0
      %p182 = por %p180, %p181
      %p183 = scmp.le.s32.totalorder 1, %s24
      %p184 = scmp.lt.s32.totalorder %s24, 3
      %p185 = pnand %p183, %p184
      %p186 = pneg %p185
      // Predicated region
      $region9: #{tpu_custom_call.1} parent=5 // pred_check
        _
      $region10: #{tpu_custom_call.1} parent=5 // pred_check_branch
        %188 = sbr.rel (%p185) target = $region12
      $region11: #{tpu_custom_call.1} parent=5 // pred_region
        %s189 = ssub.s32 %s24, 1
        // Predicated region
        $region13: #{tpu_custom_call.1} parent=11 // pred_check
          %p190 = pneg %p97
        $region14: #{tpu_custom_call.1} parent=11 // pred_check_branch
          %192 = sbr.rel (%p190) target = $region16
        $region15: #{tpu_custom_call.1} parent=11 // pred_region
          %s194 = ssub.s32 256, 256
          %195 = vsyncadd [#allocation6], %s194
          %s196 = sshll.u32 [#allocation7], 4
          %s197 = int_to_ptr.vmem [resolvable:$true] %s196
          %202 = dma.hbm_to_vmem [thread:$0]  %s2, 256, %s197, [#allocation6], 128, 128, 8
        $region16: #{tpu_custom_call.1} parent=11 // pred_fallthru
          _
      $region12: #{tpu_custom_call.1} parent=5 // pred_fallthru
        _
      %p203 = scmp.lt.s32.totalorder %s24, 2
      // Predicated region
      $region17: #{tpu_custom_call.1} parent=5 // pred_check
        %p204 = pneg %p203
      $region18: #{tpu_custom_call.1} parent=5 // pred_check_branch
        %206 = sbr.rel (%p204) target = $region20
      $region19: #{tpu_custom_call.1} parent=5 // pred_region
        // Predicated region
        $region21: #{tpu_custom_call.1} parent=19 // pred_check
          %p207 = pneg %p44
        $region22: #{tpu_custom_call.1} parent=19 // pred_check_branch
          %209 = sbr.rel (%p207) target = $region24
        $region23: #{tpu_custom_call.1} parent=19 // pred_region
          %s210 = sand.u32 %s34, 1
          %s211 = scalar_lea.sflag [#allocation3], %s210
          %s212 = sand.u32 %s34, 1
          %s213 = smul.addr %s212, 8
          %s214 = scalar_lea.vmem [#allocation2], %s213
          %s216 = ssub.s32 128, 128
          %217 = vsyncadd %s211, %s216
          %s218 = smul.addr %s24, 128
          %s219 = scalar_lea.hbm %s0, %s218
          %s221 = sshll.u32 %s214, 4
          %s222 = int_to_ptr.vmem [resolvable:$true] %s221
          %224 = dma.hbm_to_vmem [thread:$0]  %s219, 128, %s222, %s211
        $region24: #{tpu_custom_call.1} parent=19 // pred_fallthru
          _
        // Predicated region
        $region25: #{tpu_custom_call.1} parent=19 // pred_check
          %p225 = pneg %p70
        $region26: #{tpu_custom_call.1} parent=19 // pred_check_branch
          %227 = sbr.rel (%p225) target = $region28
        $region27: #{tpu_custom_call.1} parent=19 // pred_region
          %s228 = sand.u32 %s24, 1
          %s229 = scalar_lea.sflag [#allocation6], %s228
          %s230 = sand.u32 %s60, 1
          %s231 = smul.addr %s230, 8
          %s232 = scalar_lea.vmem [#allocation5], %s231
          %s234 = ssub.s32 128, 128
          %235 = vsyncadd %s229, %s234
          %s236 = smul.addr %s24, 128
          %s237 = scalar_lea.hbm %s1, %s236
          %s239 = sshll.u32 %s232, 4
          %s240 = int_to_ptr.vmem [resolvable:$true] %s239
          %242 = dma.hbm_to_vmem [thread:$0]  %s237, 128, %s240, %s229
        $region28: #{tpu_custom_call.1} parent=19 // pred_fallthru
          _
      $region20: #{tpu_custom_call.1} parent=5 // pred_fallthru
        _
      %p243 = scmp.le.s32.totalorder 1, %s24
      %p244 = scmp.lt.s32.totalorder %s24, 3
      %p245 = pnand %p243, %p244
      %p246 = pneg %p245
      // Predicated region
      $region29: #{tpu_custom_call.1} parent=5 // pred_check
        _
      $region30: #{tpu_custom_call.1} parent=5 // pred_check_branch
        %248 = sbr.rel (%p245) target = $region32
      $region31: #{tpu_custom_call.1} parent=5 // pred_region
        %s249 = ssub.s32 %s24, 1
        %s250 = sand.u32 %s37, 1
        %s251 = scalar_lea.sflag [#allocation3], %s250
        %s252 = sand.u32 %s37, 1
        %s253 = smul.addr %s252, 8
        %s254 = scalar_lea.vmem [#allocation2], %s253
        // Predicated region
        $region33: #{tpu_custom_call.1} parent=31 // pred_check
          %p255 = pneg %p50
        $region34: #{tpu_custom_call.1} parent=31 // pred_check_branch
          %257 = sbr.rel (%p255) target = $region36
        $region35: #{tpu_custom_call.1} parent=31 // pred_region
          %258 = dma.done %s251, 128
        $region36: #{tpu_custom_call.1} parent=31 // pred_fallthru
          _
        %s259 = sand.u32 %s29, 1
        %s260 = scalar_lea.sflag [#allocation6], %s259
        %s261 = sand.u32 %s63, 1
        %s262 = smul.addr %s261, 8
        %s263 = scalar_lea.vmem [#allocation5], %s262
        // Predicated region
        $region37: #{tpu_custom_call.1} parent=31 // pred_check
          %p264 = pneg %p76
        $region38: #{tpu_custom_call.1} parent=31 // pred_check_branch
          %266 = sbr.rel (%p264) target = $region40
        $region39: #{tpu_custom_call.1} parent=31 // pred_region
          %267 = dma.done %s260, 128
        $region40: #{tpu_custom_call.1} parent=31 // pred_fallthru
          _
        // Predicated region
        $region41: #{tpu_custom_call.1} parent=31 // pred_check
          %p268 = pneg %p97
        $region42: #{tpu_custom_call.1} parent=31 // pred_check_branch
          %270 = sbr.rel (%p268) target = $region44
        $region43: #{tpu_custom_call.1} parent=31 // pred_region
          %271 = dma.done [#allocation6], 256
        $region44: #{tpu_custom_call.1} parent=31 // pred_fallthru
          _
        %s272 = sand.u32 %s37, 1
        %s273 = scalar_lea.sflag [#allocation3], %s272
        %s274 = sand.u32 %s37, 1
        %s275 = smul.addr %s274, 8
        %s276 = scalar_lea.vmem [#allocation2], %s275
        %p277 = pneg %p50
        %p278 = pneg %p47
        %s279 = sand.u32 %s29, 1
        %s280 = scalar_lea.sflag [#allocation6], %s279
        %s281 = sand.u32 %s63, 1
        %s282 = smul.addr %s281, 8
        %s283 = scalar_lea.vmem [#allocation5], %s282
        %p284 = pneg %p76
        %p285 = pneg %p73
        %p286 = pneg %p97
        %p287 = pneg %p94
        %p288 = pneg %p123
        %p289 = pneg %p120
        %s290 = sand.u32 %s110, 1
        %s291 = scalar_lea.sflag [#allocation4], %s290
        %s292 = sand.u32 %s110, 1
        %s293 = smul.addr %s292, 8
        %s294 = scalar_lea.vmem [#allocation8], %s293
        %p295 = pneg %p149
        %p296 = pneg %p146
        %s297 = sand.u32 %s136, 1
        %s298 = scalar_lea.sflag [#allocation10], %s297
        %s299 = sand.u32 %s136, 1
        %s300 = scalar_lea.vmem [#allocation9], %s299
        %p301 = pneg %p175
        %p302 = pneg %p172
        %p303 = scmp.lt.s32.totalorder %s29, 1
        %s304 = scalar_select %p303, %s29, 1
        %s305 = scalar_lea.vmem %s5, %s304
        %p306 = scmp.lt.s32.totalorder %s29, 1
        %s307 = scalar_select %p306, %s29, 1
        %s308 = scalar_lea.vmem %s5, %s307
        %v309 = vld [vmem:[%s254] sm:$0xff]
        %v310 = vld [vmem:[%s263] sm:$0xff]
        %v311 = vadd.f32 %v309, %v310
        %vm312 = vcmask 130048
        %v313 = vsel %vm312, %v311, -inf
        %314 = vmax.xlane.f32.xlu0 %v313
        %v315 = vpop.xlane.xlu0 %314
        %v316 = vlaneseq
        %v317 = vand.u32 %v316, 127
        %vm318 = vcmp.eq.f32.partialorder %v311, %v315
        %v319 = vsel %vm318, %v317, 16
        %v320 = vsel %vm312, %v319, 2147483647
        %v321 = vand.u32 %v320, 65535
        %v322 = vshra.s32 %v320, 16
        %v323 = vcvt.s32.f32 %v321
        %v324 = vcvt.s32.f32 %v322
        %325 = vmin.xlane.f32.xlu0 %v324
        %v326 = vpop.xlane.xlu0 %325
        %vm327 = vcmp.eq.f32.partialorder %v324, %v326
        %v328 = vsel %vm327, %v323, inf
        %329 = vmin.xlane.f32.xlu0 %v328
        %v330 = vpop.xlane.xlu0 %329
        %v331 = vcvt.f32.s32 %v330
        %v332 = vcvt.f32.s32 %v326
        %v333 = vshll.u32 %v332, 16
        %v334 = vadd.s32 %v333, %v331
        %vm335 = vcmp.eq.s32.totalorder %v317, %v334
        %v336 = vsel %vm335, 1, 0
        %v337 = vcvt.s32.f32 %v336
        %v338 = vld [vmem:[#allocation7] sm:$0xff]
        %v339 = vld [vmem:[#allocation7 + $0x8] sm:$0xff]
        %v341 = vsel %vm312, %v337, 0
        %343 = vmatprep.subr.mxu0 0.0
        %344 = vmatpush1.msra.mxu0 0.0
        %345 = vmatprep.subr.mxu0 0.0
        %346 = vmatpush1.msra.mxu0 0.0
        %347 = vmatprep.subr.mxu0 0.0
        %348 = vmatpush1.msra.mxu0 0.0
        %349 = vmatprep.subr.mxu0 0.0
        %350 = vmatpush1.msra.mxu0 0.0
        %351 = vmatprep.subr.mxu0 0.0
        %352 = vmatpush1.msra.mxu0 0.0
        %353 = vmatprep.subr.mxu0 0.0
        %354 = vmatpush1.msra.mxu0 0.0
        %355 = vmatprep.subr.mxu0 0.0
        %356 = vmatpush1.msra.mxu0 0.0
        %357 = vmatprep.subr.mxu0 0.0
        %358 = vmatpush1.msra.mxu0 0.0
        %359 = vmatprep.subr.mxu0 0.0
        %360 = vmatpush1.msra.mxu0 0.0
        %361 = vmatprep.subr.mxu0 0.0
        %362 = vmatpush1.msra.mxu0 0.0
        %363 = vmatprep.subr.mxu0 0.0
        %364 = vmatpush1.msra.mxu0 0.0
        %365 = vmatprep.subr.mxu0 0.0
        %366 = vmatpush1.msra.mxu0 0.0
        %367 = vmatprep.subr.mxu0 0.0
        %368 = vmatpush1.msra.mxu0 0.0
        %369 = vmatprep.subr.mxu0 0.0
        %370 = vmatpush1.msra.mxu0 0.0
        %371 = vmatprep.subr.mxu0 0.0
        %372 = vmatpush1.msra.mxu0 %v339
        %373 = vmatprep.subr.mxu0 0.0
        %374 = vmatpush1.msra.mxu0 %v338
        %375 = vmatprep.subr.mxu0 0.0
        %376 = vmatpush2.msra.mxu0 0.0
        %377 = vmatprep.subr.mxu0 0.0
        %378 = vmatpush2.msra.mxu0 0.0
        %379 = vmatprep.subr.mxu0 0.0
        %380 = vmatpush2.msra.mxu0 0.0
        %381 = vmatprep.subr.mxu0 0.0
        %382 = vmatpush2.msra.mxu0 0.0
        %383 = vmatprep.subr.mxu0 0.0
        %384 = vmatpush2.msra.mxu0 0.0
        %385 = vmatprep.subr.mxu0 0.0
        %386 = vmatpush2.msra.mxu0 0.0
        %387 = vmatprep.subr.mxu0 0.0
        %388 = vmatpush2.msra.mxu0 0.0
        %389 = vmatprep.subr.mxu0 0.0
        %390 = vmatpush2.msra.mxu0 0.0
        %391 = vmatprep.subr.mxu0 0.0
        %392 = vmatpush2.msra.mxu0 0.0
        %393 = vmatprep.subr.mxu0 0.0
        %394 = vmatpush2.msra.mxu0 0.0
        %395 = vmatprep.subr.mxu0 0.0
        %396 = vmatpush2.msra.mxu0 0.0
        %397 = vmatprep.subr.mxu0 0.0
        %398 = vmatpush2.msra.mxu0 0.0
        %399 = vmatprep.subr.mxu0 0.0
        %400 = vmatpush2.msra.mxu0 0.0
        %401 = vmatprep.subr.mxu0 0.0
        %402 = vmatpush2.msra.mxu0 0.0
        %403 = vmatprep.subr.mxu0 0.0
        %404 = vmatpush2.msra.mxu0 0.0
        %405 = vmatprep.subr.mxu0 0.0
        %406 = vmatpush2.msra.mxu0 0.0
        %407 = vmatprep.mubr.f32.mxu0 0.0
        %408 = vmatmul.mubr.f32.gmra.mxu0 %v341
        %v409 = vpop.f32.mrf.mxu0
        %v410 = vadd.f32 0.0, %v409
        %v411 = vpop.f32.mrf.mxu0
        %412 = vdwg.mxu0
        %vm413 = vcmask 261120
        %414 = vst.msk [vmem:[%s294] sm:$0xff] %vm413, %v410
        %v415 = vcvt.s32.f32 %v317
        %v417 = vsel %vm312, %v415, 0
        %419 = vmatprep.subr.mxu0 0.0
        %420 = vmatpush1.xpose.msra.mxu0 0.0
        %421 = vmatprep.subr.mxu0 0.0
        %422 = vmatpush1.xpose.msra.mxu0 0.0
        %423 = vmatprep.subr.mxu0 0.0
        %424 = vmatpush1.xpose.msra.mxu0 0.0
        %425 = vmatprep.subr.mxu0 0.0
        %426 = vmatpush1.xpose.msra.mxu0 0.0
        %427 = vmatprep.subr.mxu0 0.0
        %428 = vmatpush1.xpose.msra.mxu0 0.0
        %429 = vmatprep.subr.mxu0 0.0
        %430 = vmatpush1.xpose.msra.mxu0 0.0
        %431 = vmatprep.subr.mxu0 0.0
        %432 = vmatpush1.xpose.msra.mxu0 0.0
        %433 = vmatprep.subr.mxu0 0.0
        %434 = vmatpush1.xpose.msra.mxu0 0.0
        %435 = vmatprep.subr.mxu0 0.0
        %436 = vmatpush1.xpose.msra.mxu0 0.0
        %437 = vmatprep.subr.mxu0 0.0
        %438 = vmatpush1.xpose.msra.mxu0 0.0
        %439 = vmatprep.subr.mxu0 0.0
        %440 = vmatpush1.xpose.msra.mxu0 0.0
        %441 = vmatprep.subr.mxu0 0.0
        %442 = vmatpush1.xpose.msra.mxu0 0.0
        %443 = vmatprep.subr.mxu0 0.0
        %444 = vmatpush1.xpose.msra.mxu0 0.0
        %445 = vmatprep.subr.mxu0 0.0
        %446 = vmatpush1.xpose.msra.mxu0 0.0
        %447 = vmatprep.subr.mxu0 0.0
        %448 = vmatpush1.xpose.msra.mxu0 0.0
        %449 = vmatprep.subr.mxu0 0.0
        %450 = vmatpush1.xpose.msra.mxu0 %v341
        %451 = vmatprep.subr.mxu0 0.0
        %452 = vmatpush2.xpose.msra.mxu0 0.0
        %453 = vmatprep.subr.mxu0 0.0
        %454 = vmatpush2.xpose.msra.mxu0 0.0
        %455 = vmatprep.subr.mxu0 0.0
        %456 = vmatpush2.xpose.msra.mxu0 0.0
        %457 = vmatprep.subr.mxu0 0.0
        %458 = vmatpush2.xpose.msra.mxu0 0.0
        %459 = vmatprep.subr.mxu0 0.0
        %460 = vmatpush2.xpose.msra.mxu0 0.0
        %461 = vmatprep.subr.mxu0 0.0
        %462 = vmatpush2.xpose.msra.mxu0 0.0
        %463 = vmatprep.subr.mxu0 0.0
        %464 = vmatpush2.xpose.msra.mxu0 0.0
        %465 = vmatprep.subr.mxu0 0.0
        %466 = vmatpush2.xpose.msra.mxu0 0.0
        %467 = vmatprep.subr.mxu0 0.0
        %468 = vmatpush2.xpose.msra.mxu0 0.0
        %469 = vmatprep.subr.mxu0 0.0
        %470 = vmatpush2.xpose.msra.mxu0 0.0
        %471 = vmatprep.subr.mxu0 0.0
        %472 = vmatpush2.xpose.msra.mxu0 0.0
        %473 = vmatprep.subr.mxu0 0.0
        %474 = vmatpush2.xpose.msra.mxu0 0.0
        %475 = vmatprep.subr.mxu0 0.0
        %476 = vmatpush2.xpose.msra.mxu0 0.0
        %477 = vmatprep.subr.mxu0 0.0
        %478 = vmatpush2.xpose.msra.mxu0 0.0
        %479 = vmatprep.subr.mxu0 0.0
        %480 = vmatpush2.xpose.msra.mxu0 0.0
        %481 = vmatprep.subr.mxu0 0.0
        %482 = vmatpush2.xpose.msra.mxu0 0.0
        %483 = vmatprep.mubr.f32.mxu0 0.0
        %484 = vmatmul.mubr.f32.gmra.mxu0 %v417
        %v485 = vpop.f32.mrf.mxu0
        %v486 = vadd.f32 0.0, %v485
        %v487 = vpop.f32.mrf.mxu0
        %488 = vdwg.mxu0
        %v489 = vcvt.f32.s32.to.zero.pseudo %v486
        %vm490 = vcmask 57344
        %491 = vst.msk [vmem:[%s300] sm:$0x1] %vm490, %v489
        %v492 = vsel %vm312, %v309, -inf
        %493 = vmax.xlane.f32.xlu0 %v492
        %v494 = vpop.xlane.xlu0 %493
        %v495 = vsub.f32 %v309, %v494
        %v496 = vmul.f32 %v495, 1.442695
        %v497 = vpow.pop %v496
        %v498 = vsel %vm312, %v497, 0.0
        %499 = vadd.xlane.f32.xlu0 %v498
        %v500 = vpop.xlane.xlu0 %499
        %v501 = vlog2.pop %v500
        %v502 = vmul.f32 %v501, 0.6931472
        %v503 = vrcp.pop %v500
        %v504 = vmul.f32 1.0, %v503
        %v505 = vsub.f32 2.7725887, %v502
        %v506 = vadd.f32 %v495, %v505
        %v507 = vmul.f32 %v497, %v506
        %v508 = vsel %vm312, %v507, 0.0
        %509 = vadd.xlane.f32.xlu0 %v508
        %v510 = vpop.xlane.xlu0 %509
        %v511 = vmul.f32 %v504, %v510
        %v512 = vrot.slane %v511, 4
        %v513 = vadd.f32 %v511, %v512
        %v514 = vrot.slane %v513, 2
        %v515 = vadd.f32 %v513, %v514
        %v516 = vrot.slane %v515, 1
        %v517 = vadd.f32 %v515, %v516
        %vm518 = vcmask 0
        %519 = vst.msk [vmem:[%s308] sm:$0x1] %vm518, %v517
        %s520 = sand.u32 %s110, 1
        %s521 = scalar_lea.sflag [#allocation4], %s520
        %s522 = sand.u32 %s110, 1
        %s523 = smul.addr %s522, 8
        %s524 = scalar_lea.vmem [#allocation8], %s523
        %s525 = sand.u32 %s136, 1
        %s526 = scalar_lea.sflag [#allocation10], %s525
        %s527 = sand.u32 %s136, 1
        %s528 = scalar_lea.vmem [#allocation9], %s527
        %p529 = scmp.lt.s32.totalorder %s29, 1
        %s530 = scalar_select %p529, %s29, 1
        %s531 = scalar_lea.vmem %s5, %s530
        // Predicated region
        $region45: #{tpu_custom_call.1} parent=31 // pred_check
          %p532 = pneg %p120
        $region46: #{tpu_custom_call.1} parent=31 // pred_check_branch
          %534 = sbr.rel (%p532) target = $region48
        $region47: #{tpu_custom_call.1} parent=31 // pred_region
          %s536 = ssub.s32 128, 128
          %537 = vsyncadd %s521, %s536
          %s538 = smul.addr %s29, 128
          %s539 = scalar_lea.hbm %s3, %s538
          %s541 = sshll.u32 %s524, 4
          %s542 = int_to_ptr.vmem [resolvable:$true] %s541
          %544 = dma.vmem_to_hbm [thread:$0]  %s542, 128, %s539, %s521
        $region48: #{tpu_custom_call.1} parent=31 // pred_fallthru
          _
        // Predicated region
        $region49: #{tpu_custom_call.1} parent=31 // pred_check
          %p545 = pneg %p146
        $region50: #{tpu_custom_call.1} parent=31 // pred_check_branch
          %547 = sbr.rel (%p545) target = $region52
        $region51: #{tpu_custom_call.1} parent=31 // pred_region
          %s549 = ssub.s32 16, 16
          %550 = vsyncadd %s526, %s549
          %s551 = smul.addr %s29, 16
          %s552 = scalar_lea.hbm %s4, %s551
          %s554 = sshll.u32 %s528, 4
          %s555 = int_to_ptr.vmem [resolvable:$true] %s554
          %557 = dma.vmem_to_hbm [thread:$0]  %s555, 16, %s552, %s526
        $region52: #{tpu_custom_call.1} parent=31 // pred_fallthru
          _
        // Predicated region
        $region53: #{tpu_custom_call.1} parent=31 // pred_check
          %p558 = pneg %p172
        $region54: #{tpu_custom_call.1} parent=31 // pred_check_branch
          %560 = sbr.rel (%p558) target = $region56
        $region55: #{tpu_custom_call.1} parent=31 // pred_region
          _
        $region56: #{tpu_custom_call.1} parent=31 // pred_fallthru
          _
      $region32: #{tpu_custom_call.1} parent=5 // pred_fallthru
        _
      %p561 = scmp.le.s32.totalorder 2, %s24
      // Predicated region
      $region57: #{tpu_custom_call.1} parent=5 // pred_check
        %p562 = pneg %p561
      $region58: #{tpu_custom_call.1} parent=5 // pred_check_branch
        %564 = sbr.rel (%p562) target = $region60
      $region59: #{tpu_custom_call.1} parent=5 // pred_region
        %s565 = ssub.s32 %s24, 2
        // Predicated region
        $region61: #{tpu_custom_call.1} parent=59 // pred_check
          %p566 = pneg %p126
        $region62: #{tpu_custom_call.1} parent=59 // pred_check_branch
          %568 = sbr.rel (%p566) target = $region64
        $region63: #{tpu_custom_call.1} parent=59 // pred_region
          %s569 = sand.u32 %s111, 1
          %s570 = scalar_lea.sflag [#allocation4], %s569
          %s571 = sand.u32 %s111, 1
          %s572 = smul.addr %s571, 8
          %s573 = scalar_lea.vmem [#allocation8], %s572
          %574 = dma.done %s570, 128
        $region64: #{tpu_custom_call.1} parent=59 // pred_fallthru
          _
        // Predicated region
        $region65: #{tpu_custom_call.1} parent=59 // pred_check
          %p575 = pneg %p152
        $region66: #{tpu_custom_call.1} parent=59 // pred_check_branch
          %577 = sbr.rel (%p575) target = $region68
        $region67: #{tpu_custom_call.1} parent=59 // pred_region
          %s578 = sand.u32 %s137, 1
          %s579 = scalar_lea.sflag [#allocation10], %s578
          %s580 = sand.u32 %s137, 1
          %s581 = scalar_lea.vmem [#allocation9], %s580
          %582 = dma.done %s579, 16
        $region68: #{tpu_custom_call.1} parent=59 // pred_fallthru
          _
        // Predicated region
        $region69: #{tpu_custom_call.1} parent=59 // pred_check
          %p583 = pneg %p178
        $region70: #{tpu_custom_call.1} parent=59 // pred_check_branch
          %585 = sbr.rel (%p583) target = $region72
        $region71: #{tpu_custom_call.1} parent=59 // pred_region
          %p586 = scmp.lt.s32.totalorder %s30, 1
          %s587 = scalar_select %p586, %s30, 1
          %s588 = scalar_lea.vmem %s5, %s587
        $region72: #{tpu_custom_call.1} parent=59 // pred_fallthru
          _
      $region60: #{tpu_custom_call.1} parent=5 // pred_fallthru
        _
    $region6: #{tpu_custom_call.1} parent=1 // loop_footer
      %s28 = sadd.s32 1, %s24
    $region7: #{tpu_custom_call.1} parent=1 // loop_footer_branch
      %23 = sbr.rel target = $region3
    $region8: #{tpu_custom_call.1} parent=1 // loop_exit
      _
    %589 = vsyncpa [#allocation3], 1
    %s590 = scalar_lea.sflag [#allocation3], 1
    %591 = vsyncpa %s590, 1
    %592 = vsyncpa [#allocation6], 1
    %s593 = scalar_lea.sflag [#allocation6], 1
    %594 = vsyncpa %s593, 1
    %595 = vsyncpa [#allocation4], 1
    %s596 = scalar_lea.sflag [#allocation4], 1
    %597 = vsyncpa %s596, 1
    %598 = vsyncpa [#allocation10], 1
    %s599 = scalar_lea.sflag [#allocation10], 1
    %600 = vsyncpa %s599, 1

</llo_original>
